<compile_context>
chip_gen: v6e
topology: v6e:2x2x1
jax: 0.10.0
libtpu: 0.0.40
codegen_flags: <defaults>
</compile_context>

<pallas_src>
import math
import functools

import jax
import jax.numpy as jnp
from jax import lax
from jax.experimental import pallas as pl
from jax.experimental.pallas import tpu as pltpu
import numpy as np


def _round_up(x, m):
    return (x + m - 1) // m * m


def _derive_vmem_limit():
    """~75% of physical per-core VMEM (≈48 MiB on v7x, ≈96 MiB on v5e/v6e)."""
    try:
        cap = pltpu.get_tpu_info().vmem_capacity_bytes
    except Exception:
        cap = 64 * 1024 * 1024
    return max(32 * 1024 * 1024, min((cap * 3) // 4, 112 * 1024 * 1024))


def _weight_spec(shape, index_map, single_buffer):
    """Grid-invariant weight spec; optionally single-buffered (v7x headroom)."""
    if single_buffer:
        try:
            return pl.BlockSpec(shape, index_map, pipeline_mode=pl.Buffered(1))
        except TypeError:   # older pallas without pipeline_mode kwarg
            pass
    return pl.BlockSpec(shape, index_map)


# --------------------------------------------------------------------------
# Kernel 1: fused, lane-dense Q/K/V projection (one pass over x).
# --------------------------------------------------------------------------
def _qkv_proj_kernel(x_ref, wq_ref, bq_ref, wk_ref, bk_ref, wv_ref, bv_ref,
                     q_ref, k_ref, v_ref):
    x = x_ref[0]                                                   # (ts, Ep)
    q = jnp.dot(x, wq_ref[...], preferred_element_type=jnp.float32) + bq_ref[...]
    k = jnp.dot(x, wk_ref[...], preferred_element_type=jnp.float32) + bk_ref[...]
    v = jnp.dot(x, wv_ref[...], preferred_element_type=jnp.float32) + bv_ref[...]
    q_ref[0] = q.astype(q_ref.dtype)       # Wq/bq already carry 1/sqrt(Dh)
    k_ref[0] = k.astype(k_ref.dtype)
    v_ref[0] = v.astype(v_ref.dtype)


# --------------------------------------------------------------------------
# Kernel 2: flash-style attention (online softmax over KV tiles) + output
# projection fused into the finalize step.
# --------------------------------------------------------------------------
def _attn_kernel(q_ref, k_ref, v_ref, wo_ref, bo_ref,
                 out_ref,
                 m_scr, l_scr, acc_scr,
                 *, heads, head_dim, e_real, tq, tk, mask, approx_recip):
    qi = pl.program_id(1)
    ki = pl.program_id(2)
    nk = pl.num_programs(2)
    e_pad = acc_scr.shape[-1] - e_real          # zero-padded lane columns

    # --- per-(b, q-tile) init of online-softmax state -----------------------
    @pl.when(ki == 0)
    def _init():
        m_scr[...] = jnp.full(m_scr.shape, -jnp.inf, m_scr.dtype)
        l_scr[...] = jnp.zeros(l_scr.shape, l_scr.dtype)
        acc_scr[...] = jnp.zeros(acc_scr.shape, acc_scr.dtype)

    q_all = q_ref[0]                            # (tq, Ep), scale pre-folded
    k_all = k_ref[0]                            # (tk, Ep)
    v_all = v_ref[0]                            # (tk, Ep)

    # Batched read of the per-head softmax state (one load per grid step).
    m_prev_all = m_scr[...]                     # (tq, H)
    l_prev_all = l_scr[...]                     # (tq, H)

    row0 = qi * tq
    col0 = ki * tk

    m_cols, l_cols = [], []
    for h in range(heads):                      # static unroll, heads are lane slices
        lo = h * head_dim
        hi = lo + head_dim
        q_h = q_all[:, lo:hi]                   # (tq, Dh)
        k_h = k_all[:, lo:hi]                   # (tk, Dh)
        v_h = v_all[:, lo:hi]                   # (tk, Dh)

        # q @ k^T contracting the last dims (no materialized transpose).
        # TODO(synk): verify in pl.lower_as_mlir that this NT dot_general does
        # not introduce a vxpose of k_h on v6e/v7x; if it does, store K
        # pre-transposed (Dh, tk) in the projection kernel instead.
        s = lax.dot_general(q_h, k_h, (((1,), (1,)), ((), ())),
                            preferred_element_type=jnp.float32)    # (tq, tk)
        if mask:
            # PyTorch apply_mask: zero (not -inf) the strict upper triangle.
            # Recomputed per head (cheap VPU) to avoid keeping the mask live
            # across the whole unrolled head loop (vreg pressure).
            rows = row0 + lax.broadcasted_iota(jnp.int32, (tq, tk), 0)
            cols = col0 + lax.broadcasted_iota(jnp.int32, (tq, tk), 1)
            s = jnp.where(cols > rows, jnp.float32(0.0), s)

        m_prev = m_prev_all[:, h:h + 1]                            # (tq, 1)
        m_new = jnp.maximum(m_prev, jnp.max(s, axis=-1, keepdims=True))
        alpha = jnp.exp(m_prev - m_new)
        p = jnp.exp(s - m_new)                                     # (tq, tk) f32
        l_new = alpha * l_prev_all[:, h:h + 1] + jnp.sum(p, axis=-1, keepdims=True)
        pv = jnp.dot(p.astype(v_h.dtype), v_h,
                     preferred_element_type=jnp.float32)           # (tq, Dh)
        acc_scr[:, lo:hi] = alpha * acc_scr[:, lo:hi] + pv

        m_cols.append(m_new)
        l_cols.append(l_new)

    # Batched write-back of the per-head softmax state (one store each).
    m_scr[...] = jnp.concatenate(m_cols, axis=-1)
    l_scr[...] = jnp.concatenate(l_cols, axis=-1)

    # --- finalize: normalize, output projection, lane-dense store -----------
    @pl.when(ki == nk - 1)
    def _finalize():
        inv_l = pl.reciprocal(l_scr[...], approx=approx_recip)     # (tq, H)
        inv_cols = [jnp.broadcast_to(inv_l[:, h:h + 1], (tq, head_dim))
                    for h in range(heads)]
        if e_pad:
            inv_cols.append(jnp.zeros((tq, e_pad), jnp.float32))
        inv_full = jnp.concatenate(inv_cols, axis=-1)              # (tq, Ep)
        # Read the accumulator once; never write it back.
        concat = (acc_scr[...] * inv_full).astype(wo_ref.dtype)    # (tq, Ep)
        out = jnp.dot(concat, wo_ref[...], preferred_element_type=jnp.float32)
        out_ref[0] = (out + bo_ref[...]).astype(out_ref.dtype)


# --------------------------------------------------------------------------
# Wrapper
# --------------------------------------------------------------------------
def multi_head_attention(x, params, *, heads, mask=False,
                         compute_dtype=jnp.float32,
                         q_block=256, kv_block=256, proj_block=256):
    """x: (B, S, E) float32. params: dict of stacked per-head weights.

    v5e: pass kv_block=128 (128-deep MXU) and compute_dtype=jnp.bfloat16
    (bf16-native MXU); elementwise/softmax math stays f32 in-kernel.
    """
    B, S, E = x.shape
    assert E % heads == 0
    head_dim = E // heads
    Ep = _round_up(E, 128)                       # lane-dense embedding dim

    tq = min(q_block, S)
    tk = min(kv_block, S)
    ts = min(proj_block, S)
    assert S % tq == 0 and S % tk == 0 and S % ts == 0, \
        "sequence must divide the tile sizes"

    cd = jnp.dtype(compute_dtype)
    approx_recip = (cd == jnp.dtype(jnp.bfloat16))
    scale = 1.0 / math.sqrt(head_dim)
    vmem_limit = _derive_vmem_limit()
    # Single-buffer the weights only when the tiles are big enough to matter
    # (keeps the tiny-shape test on the battle-tested default path).
    single_buf_w = Ep >= 512

    # Fuse per-head linears into single lane-dense (Ep, Ep) matmuls; fold the
    # 1/sqrt(Dh) scale into Wq/bq; zero-pad E -> Ep.
    def fuse_w(w, s=1.0):   # (H, E, Dh) -> (Ep, Ep)
        wf = jnp.transpose(w, (1, 0, 2)).reshape(E, E) * s
        return jnp.pad(wf, ((0, Ep - E), (0, Ep - E))).astype(cd)

    def fuse_b(b, s=1.0):   # (H, Dh) -> (1, Ep), f32 (added post-accumulation)
        bf = b.reshape(1, E) * s
        return jnp.pad(bf, ((0, 0), (0, Ep - E))).astype(jnp.float32)

    wq, bq = fuse_w(params["qw"], scale), fuse_b(params["qb"], scale)
    wk, bk = fuse_w(params["kw"]), fuse_b(params["kb"])
    wv, bv = fuse_w(params["vw"]), fuse_b(params["vb"])
    wo = jnp.pad(params["ow"], ((0, Ep - E), (0, Ep - E))).astype(cd)
    bo = jnp.pad(params["ob"].reshape(1, E),
                 ((0, 0), (0, Ep - E))).astype(jnp.float32)
    x_p = jnp.pad(x, ((0, 0), (0, 0), (0, Ep - E))).astype(cd)

    # ---- pass 1: fused Q/K/V projection, computed once per row ------------
    const2 = lambda b, si: (0, 0)
    row_spec = pl.BlockSpec((1, ts, Ep), lambda b, si: (b, si, 0))
    q_p, k_p, v_p = pl.pallas_call(
        _qkv_proj_kernel,
        out_shape=[jax.ShapeDtypeStruct((B, S, Ep), cd)] * 3,
        grid_spec=pltpu.PrefetchScalarGridSpec(
            num_scalar_prefetch=0,
            grid=(B, S // ts),
            in_specs=[
                row_spec,
                _weight_spec((Ep, Ep), const2, single_buf_w),
                _weight_spec((1, Ep), const2, single_buf_w),
                _weight_spec((Ep, Ep), const2, single_buf_w),
                _weight_spec((1, Ep), const2, single_buf_w),
                _weight_spec((Ep, Ep), const2, single_buf_w),
                _weight_spec((1, Ep), const2, single_buf_w),
            ],
            out_specs=[pl.BlockSpec((1, ts, Ep), lambda b, si: (b, si, 0))] * 3,
        ),
        compiler_params=pltpu.CompilerParams(
            dimension_semantics=("parallel", "parallel"),
            vmem_limit_bytes=vmem_limit),
    )(x_p, wq, bq, wk, bk, wv, bv)

    # ---- pass 2: flash attention + fused output projection ----------------
    kernel = functools.partial(
        _attn_kernel, heads=heads, head_dim=head_dim, e_real=E,
        tq=tq, tk=tk, mask=mask, approx_recip=approx_recip)

    const3 = lambda b, qi, ki: (0, 0)
    out_p = pl.pallas_call(
        kernel,
        out_shape=jax.ShapeDtypeStruct((B, S, Ep), x.dtype),
        grid_spec=pltpu.PrefetchScalarGridSpec(
            num_scalar_prefetch=0,
            grid=(B, S // tq, S // tk),
            in_specs=[
                pl.BlockSpec((1, tq, Ep), lambda b, qi, ki: (b, qi, 0)),   # Q
                pl.BlockSpec((1, tk, Ep), lambda b, qi, ki: (b, ki, 0)),   # K
                pl.BlockSpec((1, tk, Ep), lambda b, qi, ki: (b, ki, 0)),   # V
                _weight_spec((Ep, Ep), const3, single_buf_w),              # Wo
                _weight_spec((1, Ep), const3, single_buf_w),               # bo
            ],
            out_specs=pl.BlockSpec((1, tq, Ep), lambda b, qi, ki: (b, qi, 0)),
            scratch_shapes=[
                pltpu.VMEM((tq, heads), jnp.float32),   # online-softmax max
                pltpu.VMEM((tq, heads), jnp.float32),   # online-softmax sum
                pltpu.VMEM((tq, Ep), jnp.float32),      # head-output accumulator
            ]),
        compiler_params=pltpu.CompilerParams(
            dimension_semantics=("parallel", "parallel", "arbitrary"),
            vmem_limit_bytes=vmem_limit),
    )(q_p, k_p, v_p, wo, bo)

    return out_p[..., :E]


# --------------------------------------------------------------------------
# Deterministic synthetic parameters + pure-JAX reference (PyTorch semantics)
# --------------------------------------------------------------------------
def init_params(key, embedding_dim, heads):
    """nn.Linear(E, Dh): weight (Dh, E), bias (Dh,). We store transposed
    weights (E, Dh) so the reference / kernel can do x @ W directly."""
    head_dim = embedding_dim // heads
    keys = jax.random.split(key, 8)
    scale = 1.0 / math.sqrt(embedding_dim)

    def w(k, shape):
        return jax.random.uniform(k, shape, jnp.float32, -scale, scale)

    return dict(
        qw=w(keys[0], (heads, embedding_dim, head_dim)),
        qb=w(keys[1], (heads, head_dim)),
        kw=w(keys[2], (heads, embedding_dim, head_dim)),
        kb=w(keys[3], (heads, head_dim)),
        vw=w(keys[4], (heads, embedding_dim, head_dim)),
        vb=w(keys[5], (heads, head_dim)),
        ow=w(keys[6], (embedding_dim, embedding_dim)),
        ob=w(keys[7], (embedding_dim,)),
    )


def reference_mha(x, params, *, heads, mask=False):
    """Pure-JAX reference mirroring the PyTorch forward exactly."""
    B, S, E = x.shape
    head_dim = E // heads
    outs = []
    for h in range(heads):
        q = x @ params["qw"][h] + params["qb"][h]
        k = x @ params["kw"][h] + params["kb"][h]
        v = x @ params["vw"][h] + params["vb"][h]
        scores = jnp.einsum("bsd,btd->bst", q, k) / math.sqrt(head_dim)
        if mask:
            rows = lax.broadcasted_iota(jnp.int32, (S, S), 0)
            cols = lax.broadcasted_iota(jnp.int32, (S, S), 1)
            scores = jnp.where((cols > rows)[None], 0.0, scores)
        p = jax.nn.softmax(scores, axis=-1)
        outs.append(jnp.einsum("bst,btd->bsd", p, v))
    concat = jnp.concatenate(outs, axis=-1)
    return concat @ params["ow"] + params["ob"]


if __name__ == "__main__":
    B, S, E, H = 2, 8, 32, 4  # batch, seq, embedding_dim, heads

    key = jax.random.PRNGKey(0)
    k_x, k_p, k_x2 = jax.random.split(key, 3)
    x = jax.random.normal(k_x, (B, S, E), jnp.float32)
    params = init_params(k_p, E, H)

    # f32 path, unmasked (single KV tile at this size)
    out = jax.block_until_ready(multi_head_attention(x, params, heads=H, mask=False))
    ref = reference_mha(x, params, heads=H, mask=False)
    np.testing.assert_allclose(np.asarray(out), np.asarray(ref), rtol=1e-5, atol=1e-5)

    # f32 path, masked (PyTorch apply_mask semantics: zero strict upper triangle)
    out_m = jax.block_until_ready(multi_head_attention(x, params, heads=H, mask=True))
    ref_m = reference_mha(x, params, heads=H, mask=True)
    np.testing.assert_allclose(np.asarray(out_m), np.asarray(ref_m), rtol=1e-5, atol=1e-5)

    # longer sequence exercising q/kv tiling + online softmax (f32)
    S2 = 256
    x2 = jax.random.normal(k_x2, (B, S2, E), jnp.float32)
    out2 = jax.block_until_ready(
        multi_head_attention(x2, params, heads=H, mask=True,
                             q_block=128, kv_block=128))   # force multi-tile path
    ref2 = reference_mha(x2, params, heads=H, mask=True)
    np.testing.assert_allclose(np.asarray(out2), np.asarray(ref2), rtol=1e-4, atol=1e-4)

    # bf16 MXU path (f32 accumulation + f32 softmax) — recommended on all gens
    out_bf = jax.block_until_ready(
        multi_head_attention(x2, params, heads=H, mask=True,
                             compute_dtype=jnp.bfloat16))
    np.testing.assert_allclose(np.asarray(out_bf), np.asarray(ref2),
                               rtol=3e-2, atol=3e-2)

    print("KERNEL_OK")
</pallas_src>

<mosaic_0001>
module attributes {stable_mosaic.version = 11 : i64} {
  func.func @_qkv_proj_kernel(%arg0: i32, %arg1: i32, %arg2: memref<1x8x128xf32, #tpu.memory_space<vmem>>, %arg3: memref<128x128xf32, #tpu.memory_space<vmem>>, %arg4: memref<1x128xf32, #tpu.memory_space<vmem>>, %arg5: memref<128x128xf32, #tpu.memory_space<vmem>>, %arg6: memref<1x128xf32, #tpu.memory_space<vmem>>, %arg7: memref<128x128xf32, #tpu.memory_space<vmem>>, %arg8: memref<1x128xf32, #tpu.memory_space<vmem>>, %arg9: memref<1x8x128xf32, #tpu.memory_space<vmem>>, %arg10: memref<1x8x128xf32, #tpu.memory_space<vmem>>, %arg11: memref<1x8x128xf32, #tpu.memory_space<vmem>>) attributes {dimension_semantics = [#tpu.dimension_semantics<parallel>, #tpu.dimension_semantics<parallel>], iteration_bounds = array<i64: 2, 1>, scalar_prefetch = 0 : i64, scratch_operands = 0 : i64, tpu.core_type = #tpu.core_type<tc>, window_params = [{transform_indices = @transform_0, window_bounds = array<i64: 1, 8, 128>}, {pipeline_mode = #tpu.pipeline_mode<synchronous>, transform_indices = @transform_1, window_bounds = array<i64: 128, 128>}, {pipeline_mode = #tpu.pipeline_mode<synchronous>, transform_indices = @transform_2, window_bounds = array<i64: 1, 128>}, {pipeline_mode = #tpu.pipeline_mode<synchronous>, transform_indices = @transform_3, window_bounds = array<i64: 128, 128>}, {pipeline_mode = #tpu.pipeline_mode<synchronous>, transform_indices = @transform_4, window_bounds = array<i64: 1, 128>}, {pipeline_mode = #tpu.pipeline_mode<synchronous>, transform_indices = @transform_5, window_bounds = array<i64: 128, 128>}, {pipeline_mode = #tpu.pipeline_mode<synchronous>, transform_indices = @transform_6, window_bounds = array<i64: 1, 128>}, {transform_indices = @transform_7, window_bounds = array<i64: 1, 8, 128>}, {transform_indices = @transform_8, window_bounds = array<i64: 1, 8, 128>}, {transform_indices = @transform_9, window_bounds = array<i64: 1, 8, 128>}]} {
    %c0 = arith.constant 0 : index
    %c0_0 = arith.constant 0 : index
    %c0_1 = arith.constant 0 : index
    %0 = vector.load %arg2[%c0, %c0_0, %c0_1] : memref<1x8x128xf32, #tpu.memory_space<vmem>>, vector<1x8x128xf32>
    %1 = vector.shape_cast %0 : vector<1x8x128xf32> to vector<8x128xf32>
    %c0_2 = arith.constant 0 : index
    %c0_3 = arith.constant 0 : index
    %2 = vector.load %arg3[%c0_2, %c0_3] : memref<128x128xf32, #tpu.memory_space<vmem>>, vector<128x128xf32>
    %cst = arith.constant dense<0.000000e+00> : vector<8x128xf32>
    %3 = tpu.matmul %1, %2, %cst {dimension_numbers = #tpu.dot_dimension_numbers<[1], [0], [0], [1], [0, 0, 1, 1], [], []>} : vector<8x128xf32>, vector<128x128xf32>, vector<8x128xf32> -> vector<8x128xf32>
    %c0_4 = arith.constant 0 : index
    %c0_5 = arith.constant 0 : index
    %4 = vector.load %arg4[%c0_4, %c0_5] : memref<1x128xf32, #tpu.memory_space<vmem>>, vector<1x128xf32>
    %5 = vector.broadcast %4 : vector<1x128xf32> to vector<8x128xf32>
    %6 = arith.addf %3, %5 : vector<8x128xf32>
    %c0_6 = arith.constant 0 : index
    %c0_7 = arith.constant 0 : index
    %7 = vector.load %arg5[%c0_6, %c0_7] : memref<128x128xf32, #tpu.memory_space<vmem>>, vector<128x128xf32>
    %cst_8 = arith.constant dense<0.000000e+00> : vector<8x128xf32>
    %8 = tpu.matmul %1, %7, %cst_8 {dimension_numbers = #tpu.dot_dimension_numbers<[1], [0], [0], [1], [0, 0, 1, 1], [], []>} : vector<8x128xf32>, vector<128x128xf32>, vector<8x128xf32> -> vector<8x128xf32>
    %c0_9 = arith.constant 0 : index
    %c0_10 = arith.constant 0 : index
    %9 = vector.load %arg6[%c0_9, %c0_10] : memref<1x128xf32, #tpu.memory_space<vmem>>, vector<1x128xf32>
    %10 = vector.broadcast %9 : vector<1x128xf32> to vector<8x128xf32>
    %11 = arith.addf %8, %10 : vector<8x128xf32>
    %c0_11 = arith.constant 0 : index
    %c0_12 = arith.constant 0 : index
    %12 = vector.load %arg7[%c0_11, %c0_12] : memref<128x128xf32, #tpu.memory_space<vmem>>, vector<128x128xf32>
    %cst_13 = arith.constant dense<0.000000e+00> : vector<8x128xf32>
    %13 = tpu.matmul %1, %12, %cst_13 {dimension_numbers = #tpu.dot_dimension_numbers<[1], [0], [0], [1], [0, 0, 1, 1], [], []>} : vector<8x128xf32>, vector<128x128xf32>, vector<8x128xf32> -> vector<8x128xf32>
    %c0_14 = arith.constant 0 : index
    %c0_15 = arith.constant 0 : index
    %14 = vector.load %arg8[%c0_14, %c0_15] : memref<1x128xf32, #tpu.memory_space<vmem>>, vector<1x128xf32>
    %15 = vector.broadcast %14 : vector<1x128xf32> to vector<8x128xf32>
    %16 = arith.addf %13, %15 : vector<8x128xf32>
    %c0_16 = arith.constant 0 : index
    %c0_17 = arith.constant 0 : index
    %c0_18 = arith.constant 0 : index
    %17 = vector.load %arg9[%c0_16, %c0_17, %c0_18] : memref<1x8x128xf32, #tpu.memory_space<vmem>>, vector<1x8x128xf32>
    %18 = vector.shape_cast %17 : vector<1x8x128xf32> to vector<8x128xf32>
    %19 = vector.shape_cast %6 : vector<8x128xf32> to vector<1x8x128xf32>
    tpu.vector_store %arg9[%c0_16, %c0_17, %c0_18], %19 {strides = array<i32>} : memref<1x8x128xf32, #tpu.memory_space<vmem>>, vector<1x8x128xf32>,
    %c0_19 = arith.constant 0 : index
    %c0_20 = arith.constant 0 : index
    %c0_21 = arith.constant 0 : index
    %20 = vector.load %arg10[%c0_19, %c0_20, %c0_21] : memref<1x8x128xf32, #tpu.memory_space<vmem>>, vector<1x8x128xf32>
    %21 = vector.shape_cast %20 : vector<1x8x128xf32> to vector<8x128xf32>
    %22 = vector.shape_cast %11 : vector<8x128xf32> to vector<1x8x128xf32>
    tpu.vector_store %arg10[%c0_19, %c0_20, %c0_21], %22 {strides = array<i32>} : memref<1x8x128xf32, #tpu.memory_space<vmem>>, vector<1x8x128xf32>,
    %c0_22 = arith.constant 0 : index
    %c0_23 = arith.constant 0 : index
    %c0_24 = arith.constant 0 : index
    %23 = vector.load %arg11[%c0_22, %c0_23, %c0_24] : memref<1x8x128xf32, #tpu.memory_space<vmem>>, vector<1x8x128xf32>
    %24 = vector.shape_cast %23 : vector<1x8x128xf32> to vector<8x128xf32>
    %25 = vector.shape_cast %16 : vector<8x128xf32> to vector<1x8x128xf32>
    tpu.vector_store %arg11[%c0_22, %c0_23, %c0_24], %25 {strides = array<i32>} : memref<1x8x128xf32, #tpu.memory_space<vmem>>, vector<1x8x128xf32>,
    return
  }
  func.func @transform_0(%arg0: i32, %arg1: i32) -> (i32, i32, i32) {
    %c0_i32 = arith.constant 0 : i32
    %c0_i32_0 = arith.constant 0 : i32
    return %arg0, %arg1, %c0_i32 : i32, i32, i32
  }
  func.func @transform_1(%arg0: i32, %arg1: i32) -> (i32, i32) {
    %c0_i32 = arith.constant 0 : i32
    %c0_i32_0 = arith.constant 0 : i32
    %c0_i32_1 = arith.constant 0 : i32
    return %c0_i32, %c0_i32_0 : i32, i32
  }
  func.func @transform_2(%arg0: i32, %arg1: i32) -> (i32, i32) {
    %c0_i32 = arith.constant 0 : i32
    %c0_i32_0 = arith.constant 0 : i32
    %c0_i32_1 = arith.constant 0 : i32
    return %c0_i32, %c0_i32_0 : i32, i32
  }
  func.func @transform_3(%arg0: i32, %arg1: i32) -> (i32, i32) {
    %c0_i32 = arith.constant 0 : i32
    %c0_i32_0 = arith.constant 0 : i32
    %c0_i32_1 = arith.constant 0 : i32
    return %c0_i32, %c0_i32_0 : i32, i32
  }
  func.func @transform_4(%arg0: i32, %arg1: i32) -> (i32, i32) {
    %c0_i32 = arith.constant 0 : i32
    %c0_i32_0 = arith.constant 0 : i32
    %c0_i32_1 = arith.constant 0 : i32
    return %c0_i32, %c0_i32_0 : i32, i32
  }
  func.func @transform_5(%arg0: i32, %arg1: i32) -> (i32, i32) {
    %c0_i32 = arith.constant 0 : i32
    %c0_i32_0 = arith.constant 0 : i32
    %c0_i32_1 = arith.constant 0 : i32
    return %c0_i32, %c0_i32_0 : i32, i32
  }
  func.func @transform_6(%arg0: i32, %arg1: i32) -> (i32, i32) {
    %c0_i32 = arith.constant 0 : i32
    %c0_i32_0 = arith.constant 0 : i32
    %c0_i32_1 = arith.constant 0 : i32
    return %c0_i32, %c0_i32_0 : i32, i32
  }
  func.func @transform_7(%arg0: i32, %arg1: i32) -> (i32, i32, i32) {
    %c0_i32 = arith.constant 0 : i32
    %c0_i32_0 = arith.constant 0 : i32
    return %arg0, %arg1, %c0_i32 : i32, i32, i32
  }
  func.func @transform_8(%arg0: i32, %arg1: i32) -> (i32, i32, i32) {
    %c0_i32 = arith.constant 0 : i32
    %c0_i32_0 = arith.constant 0 : i32
    return %arg0, %arg1, %c0_i32 : i32, i32, i32
  }
  func.func @transform_9(%arg0: i32, %arg1: i32) -> (i32, i32, i32) {
    %c0_i32 = arith.constant 0 : i32
    %c0_i32_0 = arith.constant 0 : i32
    return %arg0, %arg1, %c0_i32 : i32, i32, i32
  }
}

</mosaic_0001>

<llo_original>
// kernel: tpu_custom_call.1
$region0: #{tpu_custom_call.1}
  #allocation0 [shape = 'u32[]', space=smem, size = 0x4, offset = 0x4, fixed_abs, tag = 'smem constant byte address 0x4 - core index']
  #allocation1 [shape = 'u32[144,128]{1,0:T(1,128)}', space=vmem, size = 0x12000, scoped, tag = 'internal scratch']
  %s0 = inlined_call_operand.hbm [shape: f32[2,8,128], index: 0, kind: input, shape index: {}]
  %s1 = inlined_call_operand.hbm [shape: f32[128,128], index: 1, kind: input, shape index: {}]
  %s2 = inlined_call_operand.vmem [shape: f32[1,128], index: 2, kind: input, shape index: {}]
  %s3 = inlined_call_operand.hbm [shape: f32[128,128], index: 3, kind: input, shape index: {}]
  %s4 = inlined_call_operand.vmem [shape: f32[1,128], index: 4, kind: input, shape index: {}]
  %s5 = inlined_call_operand.hbm [shape: f32[128,128], index: 5, kind: input, shape index: {}]
  %s6 = inlined_call_operand.vmem [shape: f32[1,128], index: 6, kind: input, shape index: {}]
  %s7 = inlined_call_operand.hbm [shape: f32[2,8,128], index: 7, kind: output, shape index: {0}]
  %s8 = inlined_call_operand.hbm [shape: f32[2,8,128], index: 8, kind: output, shape index: {1}]
  %s9 = inlined_call_operand.hbm [shape: f32[2,8,128], index: 9, kind: output, shape index: {2}]
  %10 = xla_tuple %s7, %s8, %s9
  %s11 = sld [smem:[#allocation0]]
  $region93: #{tpu_custom_call.1} parent=0
    _
  %s13 = ssub.s32 1, %s11
  %s14 = scalar_select 0, %s13, %s11
  $region1: #{tpu_custom_call.1} parent=0
    #allocation2 [shape = 'u8[8192]{0}', space=vmem, size = 0x2000, scoped, tag = 'input window, operand 0']
    #allocation3 [shape = 's32[2]{0}', space=sflag, size = 0x8, scoped, tag = 'scoped memory for tpu_custom_call.1']
    #allocation4 [shape = 's32[2]{0}', space=sflag, size = 0x8, scoped, tag = 'scoped memory for tpu_custom_call.1']
    #allocation5 [shape = 'u8[65536]{0}', space=vmem, size = 0x10000, scoped, tag = 'input window, operand 1, single buffered']
    #allocation6 [shape = 's32[1]{0}', space=sflag, size = 0x4, scoped, tag = 'scoped memory for tpu_custom_call.1']
    #allocation7 [shape = 'u8[65536]{0}', space=vmem, size = 0x10000, scoped, tag = 'input window, operand 3, single buffered']
    #allocation8 [shape = 'u8[65536]{0}', space=vmem, size = 0x10000, scoped, tag = 'input window, operand 5, single buffered']
    #allocation9 [shape = 's32[1]{0}', space=sflag, size = 0x4, scoped, tag = 'scoped memory for tpu_custom_call.1']
    #allocation10 [shape = 'u8[8192]{0}', space=vmem, size = 0x2000, scoped, tag = 'output window, operand 0']
    #allocation11 [shape = 'u8[8192]{0}', space=vmem, size = 0x2000, scoped, tag = 'output window, operand 1']
    #allocation12 [shape = 's32[2]{0}', space=sflag, size = 0x8, scoped, tag = 'scoped memory for tpu_custom_call.1']
    #allocation13 [shape = 'u8[8192]{0}', space=vmem, size = 0x2000, scoped, tag = 'output window, operand 2']
    %15 = vsyncpa [#allocation3], 0
    %s16 = scalar_lea.sflag [#allocation3], 1
    %17 = vsyncpa %s16, 0
    %18 = vsyncpa [#allocation6], 0
    %19 = vsyncpa [#allocation9], 0
    %20 = vsyncpa [#allocation4], 0
    %s21 = scalar_lea.sflag [#allocation4], 1
    %22 = vsyncpa %s21, 0
    %23 = vsyncpa [#allocation12], 0
    %s24 = scalar_lea.sflag [#allocation12], 1
    %25 = vsyncpa %s24, 0
    loop: start=0, step=1, limit=4
    $region2: #{tpu_custom_call.1} parent=1 // loop_pre_header
      _
    $region3: #{tpu_custom_call.1} parent=1 // loop_header
      %s27 = sphi 0, %s31
      %p28 = scmp.ge.s32.totalorder %s27, 4
      %s34 = sphi 0, %s46
      %s35 = sphi 0, %s42
      %s36 = sphi 0, %s34
      %s37 = sphi 0, %s35
      %s38 = sphi 0, %s36
      %s39 = sphi 0, %s37
      %s51 = sphi 0, %s53
      %s54 = sphi 0, %s51
      %s55 = sphi 0, %s54
      %s71 = sphi 0, %s55
      %s75 = sphi 0, %s75
      %s77 = sphi 0, %s75
      %s78 = sphi 0, %s77
      %s92 = sphi 0, %s78
      %s96 = sphi 0, %s96
      %s98 = sphi 0, %s96
      %s99 = sphi 0, %s98
      %s113 = sphi 0, %s99
      %s117 = sphi 0, %s117
      %s119 = sphi 0, %s117
      %s120 = sphi 0, %s119
      %s134 = sphi 0, %s120
      %s138 = sphi 0, %s138
      %s140 = sphi 0, %s138
      %s141 = sphi 0, %s140
      %s155 = sphi 0, %s141
      %s159 = sphi 0, %s159
      %s161 = sphi 0, %s159
      %s162 = sphi 0, %s161
      %s176 = sphi 0, %s162
      %s180 = sphi 0, %s180
      %s182 = sphi 0, %s180
      %s183 = sphi 0, %s182
      %s197 = sphi 0, %s183
      %s205 = sphi 0, %s207
      %s208 = sphi 0, %s205
      %s209 = sphi 0, %s208
      %s225 = sphi 0, %s209
      %s233 = sphi 0, %s235
      %s236 = sphi 0, %s233
      %s237 = sphi 0, %s236
      %s253 = sphi 0, %s237
      %s261 = sphi 0, %s263
      %s264 = sphi 0, %s261
      %s265 = sphi 0, %s264
      %s281 = sphi 0, %s265
    $region4: #{tpu_custom_call.1} parent=1 // loop_header_branch
      %30 = sbr.rel (%p28) target = $region8
    $region5: #{tpu_custom_call.1} parent=1 // loop_body
      %s32 = ssub.s32 %s27, 1
      %s33 = ssub.s32 %s27, 2
      %s40 = sadd.s32 1, %s35
      %p41 = scmp.ge.s32.totalorder %s40, 1
      %s42 = scalar_select %p41, 0, %s40
      %s43 = sadd.s32 1, %s34
      %s44 = scalar_select %p41, %s43, %s34
      %p45 = scmp.ge.s32.totalorder %s44, 2
      %s46 = scalar_select %p45, 0, %s44
      %s47 = ssub.s32 %s34, %s46
      %s48 = ssub.s32 %s35, %s42
      %s49 = sor.u32 %s47, %s48
      %p50 = scmp.eq.s32.totalorder %s49, 0
      %s52 = sadd.s32 %s51, 1
      %s53 = scalar_select %p50, %s51, %s52
      %p56 = pneg %p50
      %p57 = scmp.eq.s32.totalorder %s27, 1
      %p58 = por %p56, %p57
      %p59 = scmp.ne.s32.totalorder %s51, %s54
      %p60 = scmp.eq.s32.totalorder %s27, 0
      %p61 = por %p59, %p60
      %p62 = scmp.ne.s32.totalorder %s51, %s54
      %p63 = scmp.eq.s32.totalorder %s32, 1
      %p64 = por %p62, %p63
      %p65 = scmp.ne.s32.totalorder %s54, %s55
      %p66 = scmp.eq.s32.totalorder %s32, 0
      %p67 = por %p65, %p66
      %p68 = scmp.ne.s32.totalorder %s54, %s55
      %p69 = scmp.eq.s32.totalorder %s33, 1
      %p70 = por %p68, %p69
      %p72 = scmp.ne.s32.totalorder %s55, %s71
      %p73 = scmp.eq.s32.totalorder %s33, 0
      %p74 = por %p72, %p73
      %s76 = sadd.s32 %s75, 1
      %p79 = scmp.eq.s32.totalorder %s27, 1
      %p80 = scmp.ne.s32.totalorder %s75, %s77
      %p81 = scmp.eq.s32.totalorder %s27, 0
      %p82 = por %p80, %p81
      %p83 = scmp.ne.s32.totalorder %s75, %s77
      %p84 = scmp.eq.s32.totalorder %s32, 1
      %p85 = por %p83, %p84
      %p86 = scmp.ne.s32.totalorder %s77, %s78
      %p87 = scmp.eq.s32.totalorder %s32, 0
      %p88 = por %p86, %p87
      %p89 = scmp.ne.s32.totalorder %s77, %s78
      %p90 = scmp.eq.s32.totalorder %s33, 1
      %p91 = por %p89, %p90
      %p93 = scmp.ne.s32.totalorder %s78, %s92
      %p94 = scmp.eq.s32.totalorder %s33, 0
      %p95 = por %p93, %p94
      %s97 = sadd.s32 %s96, 1
      %p100 = scmp.eq.s32.totalorder %s27, 1
      %p101 = scmp.ne.s32.totalorder %s96, %s98
      %p102 = scmp.eq.s32.totalorder %s27, 0
      %p103 = por %p101, %p102
      %p104 = scmp.ne.s32.totalorder %s96, %s98
      %p105 = scmp.eq.s32.totalorder %s32, 1
      %p106 = por %p104, %p105
      %p107 = scmp.ne.s32.totalorder %s98, %s99
      %p108 = scmp.eq.s32.totalorder %s32, 0
      %p109 = por %p107, %p108
      %p110 = scmp.ne.s32.totalorder %s98, %s99
      %p111 = scmp.eq.s32.totalorder %s33, 1
      %p112 = por %p110, %p111
      %p114 = scmp.ne.s32.totalorder %s99, %s113
      %p115 = scmp.eq.s32.totalorder %s33, 0
      %p116 = por %p114, %p115
      %s118 = sadd.s32 %s117, 1
      %p121 = scmp.eq.s32.totalorder %s27, 1
      %p122 = scmp.ne.s32.totalorder %s117, %s119
      %p123 = scmp.eq.s32.totalorder %s27, 0
      %p124 = por %p122, %p123
      %p125 = scmp.ne.s32.totalorder %s117, %s119
      %p126 = scmp.eq.s32.totalorder %s32, 1
      %p127 = por %p125, %p126
      %p128 = scmp.ne.s32.totalorder %s119, %s120
      %p129 = scmp.eq.s32.totalorder %s32, 0
      %p130 = por %p128, %p129
      %p131 = scmp.ne.s32.totalorder %s119, %s120
      %p132 = scmp.eq.s32.totalorder %s33, 1
      %p133 = por %p131, %p132
      %p135 = scmp.ne.s32.totalorder %s120, %s134
      %p136 = scmp.eq.s32.totalorder %s33, 0
      %p137 = por %p135, %p136
      %s139 = sadd.s32 %s138, 1
      %p142 = scmp.eq.s32.totalorder %s27, 1
      %p143 = scmp.ne.s32.totalorder %s138, %s140
      %p144 = scmp.eq.s32.totalorder %s27, 0
      %p145 = por %p143, %p144
      %p146 = scmp.ne.s32.totalorder %s138, %s140
      %p147 = scmp.eq.s32.totalorder %s32, 1
      %p148 = por %p146, %p147
      %p149 = scmp.ne.s32.totalorder %s140, %s141
      %p150 = scmp.eq.s32.totalorder %s32, 0
      %p151 = por %p149, %p150
      %p152 = scmp.ne.s32.totalorder %s140, %s141
      %p153 = scmp.eq.s32.totalorder %s33, 1
      %p154 = por %p152, %p153
      %p156 = scmp.ne.s32.totalorder %s141, %s155
      %p157 = scmp.eq.s32.totalorder %s33, 0
      %p158 = por %p156, %p157
      %s160 = sadd.s32 %s159, 1
      %p163 = scmp.eq.s32.totalorder %s27, 1
      %p164 = scmp.ne.s32.totalorder %s159, %s161
      %p165 = scmp.eq.s32.totalorder %s27, 0
      %p166 = por %p164, %p165
      %p167 = scmp.ne.s32.totalorder %s159, %s161
      %p168 = scmp.eq.s32.totalorder %s32, 1
      %p169 = por %p167, %p168
      %p170 = scmp.ne.s32.totalorder %s161, %s162
      %p171 = scmp.eq.s32.totalorder %s32, 0
      %p172 = por %p170, %p171
      %p173 = scmp.ne.s32.totalorder %s161, %s162
      %p174 = scmp.eq.s32.totalorder %s33, 1
      %p175 = por %p173, %p174
      %p177 = scmp.ne.s32.totalorder %s162, %s176
      %p178 = scmp.eq.s32.totalorder %s33, 0
      %p179 = por %p177, %p178
      %s181 = sadd.s32 %s180, 1
      %p184 = scmp.eq.s32.totalorder %s27, 1
      %p185 = scmp.ne.s32.totalorder %s180, %s182
      %p186 = scmp.eq.s32.totalorder %s27, 0
      %p187 = por %p185, %p186
      %p188 = scmp.ne.s32.totalorder %s180, %s182
      %p189 = scmp.eq.s32.totalorder %s32, 1
      %p190 = por %p188, %p189
      %p191 = scmp.ne.s32.totalorder %s182, %s183
      %p192 = scmp.eq.s32.totalorder %s32, 0
      %p193 = por %p191, %p192
      %p194 = scmp.ne.s32.totalorder %s182, %s183
      %p195 = scmp.eq.s32.totalorder %s33, 1
      %p196 = por %p194, %p195
      %p198 = scmp.ne.s32.totalorder %s183, %s197
      %p199 = scmp.eq.s32.totalorder %s33, 0
      %p200 = por %p198, %p199
      %s201 = ssub.s32 %s34, %s46
      %s202 = ssub.s32 %s35, %s42
      %s203 = sor.u32 %s201, %s202
      %p204 = scmp.eq.s32.totalorder %s203, 0
      %s206 = sadd.s32 %s205, 1
      %s207 = scalar_select %p204, %s205, %s206
      %p210 = pneg %p204
      %p211 = scmp.eq.s32.totalorder %s27, 1
      %p212 = por %p210, %p211
      %p213 = scmp.ne.s32.totalorder %s205, %s208
      %p214 = scmp.eq.s32.totalorder %s27, 0
      %p215 = por %p213, %p214
      %p216 = scmp.ne.s32.totalorder %s205, %s208
      %p217 = scmp.eq.s32.totalorder %s32, 1
      %p218 = por %p216, %p217
      %p219 = scmp.ne.s32.totalorder %s208, %s209
      %p220 = scmp.eq.s32.totalorder %s32, 0
      %p221 = por %p219, %p220
      %p222 = scmp.ne.s32.totalorder %s208, %s209
      %p223 = scmp.eq.s32.totalorder %s33, 1
      %p224 = por %p222, %p223
      %p226 = scmp.ne.s32.totalorder %s209, %s225
      %p227 = scmp.eq.s32.totalorder %s33, 0
      %p228 = por %p226, %p227
      %s229 = ssub.s32 %s34, %s46
      %s230 = ssub.s32 %s35, %s42
      %s231 = sor.u32 %s229, %s230
      %p232 = scmp.eq.s32.totalorder %s231, 0
      %s234 = sadd.s32 %s233, 1
      %s235 = scalar_select %p232, %s233, %s234
      %p238 = pneg %p232
      %p239 = scmp.eq.s32.totalorder %s27, 1
      %p240 = por %p238, %p239
      %p241 = scmp.ne.s32.totalorder %s233, %s236
      %p242 = scmp.eq.s32.totalorder %s27, 0
      %p243 = por %p241, %p242
      %p244 = scmp.ne.s32.totalorder %s233, %s236
      %p245 = scmp.eq.s32.totalorder %s32, 1
      %p246 = por %p244, %p245
      %p247 = scmp.ne.s32.totalorder %s236, %s237
      %p248 = scmp.eq.s32.totalorder %s32, 0
      %p249 = por %p247, %p248
      %p250 = scmp.ne.s32.totalorder %s236, %s237
      %p251 = scmp.eq.s32.totalorder %s33, 1
      %p252 = por %p250, %p251
      %p254 = scmp.ne.s32.totalorder %s237, %s253
      %p255 = scmp.eq.s32.totalorder %s33, 0
      %p256 = por %p254, %p255
      %s257 = ssub.s32 %s34, %s46
      %s258 = ssub.s32 %s35, %s42
      %s259 = sor.u32 %s257, %s258
      %p260 = scmp.eq.s32.totalorder %s259, 0
      %s262 = sadd.s32 %s261, 1
      %s263 = scalar_select %p260, %s261, %s262
      %p266 = pneg %p260
      %p267 = scmp.eq.s32.totalorder %s27, 1
      %p268 = por %p266, %p267
      %p269 = scmp.ne.s32.totalorder %s261, %s264
      %p270 = scmp.eq.s32.totalorder %s27, 0
      %p271 = por %p269, %p270
      %p272 = scmp.ne.s32.totalorder %s261, %s264
      %p273 = scmp.eq.s32.totalorder %s32, 1
      %p274 = por %p272, %p273
      %p275 = scmp.ne.s32.totalorder %s264, %s265
      %p276 = scmp.eq.s32.totalorder %s32, 0
      %p277 = por %p275, %p276
      %p278 = scmp.ne.s32.totalorder %s264, %s265
      %p279 = scmp.eq.s32.totalorder %s33, 1
      %p280 = por %p278, %p279
      %p282 = scmp.ne.s32.totalorder %s265, %s281
      %p283 = scmp.eq.s32.totalorder %s33, 0
      %p284 = por %p282, %p283
      %p285 = scmp.le.s32.totalorder 1, %s27
      %p286 = scmp.lt.s32.totalorder %s27, 3
      %p287 = pnand %p285, %p286
      %p288 = pneg %p287
      // Predicated region
      $region9: #{tpu_custom_call.1} parent=5 // pred_check
        _
      $region10: #{tpu_custom_call.1} parent=5 // pred_check_branch
        %290 = sbr.rel (%p287) target = $region12
      $region11: #{tpu_custom_call.1} parent=5 // pred_region
        %s291 = ssub.s32 %s27, 1
        // Predicated region
        $region13: #{tpu_custom_call.1} parent=11 // pred_check
          %p292 = pneg %p88
        $region14: #{tpu_custom_call.1} parent=11 // pred_check_branch
          %294 = sbr.rel (%p292) target = $region16
        $region15: #{tpu_custom_call.1} parent=11 // pred_region
          %s296 = ssub.s32 2048, 2048
          %297 = vsyncadd [#allocation6], %s296
          %s298 = sshll.u32 [#allocation5], 4
          %s299 = int_to_ptr.vmem [resolvable:$true] %s298
          %304 = dma.hbm_to_vmem [thread:$0]  %s1, 2048, %s299, [#allocation6], 128, 128, 8
        $region16: #{tpu_custom_call.1} parent=11 // pred_fallthru
          _
        // Predicated region
        $region17: #{tpu_custom_call.1} parent=11 // pred_check
          %p305 = pneg %p109
        $region18: #{tpu_custom_call.1} parent=11 // pred_check_branch
          %307 = sbr.rel (%p305) target = $region20
        $region19: #{tpu_custom_call.1} parent=11 // pred_region
          _
        $region20: #{tpu_custom_call.1} parent=11 // pred_fallthru
          _
        // Predicated region
        $region21: #{tpu_custom_call.1} parent=11 // pred_check
          %p308 = pneg %p130
        $region22: #{tpu_custom_call.1} parent=11 // pred_check_branch
          %310 = sbr.rel (%p308) target = $region24
        $region23: #{tpu_custom_call.1} parent=11 // pred_region
          %s312 = ssub.s32 2048, 2048
          %313 = vsyncadd [#allocation6], %s312
          %s314 = sshll.u32 [#allocation7], 4
          %s315 = int_to_ptr.vmem [resolvable:$true] %s314
          %320 = dma.hbm_to_vmem [thread:$0]  %s3, 2048, %s315, [#allocation6], 128, 128, 8
        $region24: #{tpu_custom_call.1} parent=11 // pred_fallthru
          _
        // Predicated region
        $region25: #{tpu_custom_call.1} parent=11 // pred_check
          %p321 = pneg %p151
        $region26: #{tpu_custom_call.1} parent=11 // pred_check_branch
          %323 = sbr.rel (%p321) target = $region28
        $region27: #{tpu_custom_call.1} parent=11 // pred_region
          _
        $region28: #{tpu_custom_call.1} parent=11 // pred_fallthru
          _
        // Predicated region
        $region29: #{tpu_custom_call.1} parent=11 // pred_check
          %p324 = pneg %p172
        $region30: #{tpu_custom_call.1} parent=11 // pred_check_branch
          %326 = sbr.rel (%p324) target = $region32
        $region31: #{tpu_custom_call.1} parent=11 // pred_region
          %s328 = ssub.s32 2048, 2048
          %329 = vsyncadd [#allocation9], %s328
          %s330 = sshll.u32 [#allocation8], 4
          %s331 = int_to_ptr.vmem [resolvable:$true] %s330
          %336 = dma.hbm_to_vmem [thread:$0]  %s5, 2048, %s331, [#allocation9], 128, 128, 8
        $region32: #{tpu_custom_call.1} parent=11 // pred_fallthru
          _
        // Predicated region
        $region33: #{tpu_custom_call.1} parent=11 // pred_check
          %p337 = pneg %p193
        $region34: #{tpu_custom_call.1} parent=11 // pred_check_branch
          %339 = sbr.rel (%p337) target = $region36
        $region35: #{tpu_custom_call.1} parent=11 // pred_region
          _
        $region36: #{tpu_custom_call.1} parent=11 // pred_fallthru
          _
      $region12: #{tpu_custom_call.1} parent=5 // pred_fallthru
        _
      %p340 = scmp.lt.s32.totalorder %s27, 2
      // Predicated region
      $region37: #{tpu_custom_call.1} parent=5 // pred_check
        %p341 = pneg %p340
      $region38: #{tpu_custom_call.1} parent=5 // pred_check_branch
        %343 = sbr.rel (%p341) target = $region40
      $region39: #{tpu_custom_call.1} parent=5 // pred_region
        // Predicated region
        $region41: #{tpu_custom_call.1} parent=39 // pred_check
          %p344 = pneg %p61
        $region42: #{tpu_custom_call.1} parent=39 // pred_check_branch
          %346 = sbr.rel (%p344) target = $region44
        $region43: #{tpu_custom_call.1} parent=39 // pred_region
          %s347 = sand.u32 %s51, 1
          %s348 = scalar_lea.sflag [#allocation3], %s347
          %s349 = sand.u32 %s51, 1
          %s350 = smul.addr %s349, 8
          %s351 = scalar_lea.vmem [#allocation2], %s350
          %s353 = ssub.s32 128, 128
          %354 = vsyncadd %s348, %s353
          %s355 = sadd.s32 %s35, %s34
          %s356 = smul.addr %s355, 128
          %s357 = scalar_lea.hbm %s0, %s356
          %s359 = sshll.u32 %s351, 4
          %s360 = int_to_ptr.vmem [resolvable:$true] %s359
          %362 = dma.hbm_to_vmem [thread:$0]  %s357, 128, %s360, %s348
        $region44: #{tpu_custom_call.1} parent=39 // pred_fallthru
          _
      $region40: #{tpu_custom_call.1} parent=5 // pred_fallthru
        _
      %p363 = scmp.le.s32.totalorder 1, %s27
      %p364 = scmp.lt.s32.totalorder %s27, 3
      %p365 = pnand %p363, %p364
      %p366 = pneg %p365
      // Predicated region
      $region45: #{tpu_custom_call.1} parent=5 // pred_check
        _
      $region46: #{tpu_custom_call.1} parent=5 // pred_check_branch
        %368 = sbr.rel (%p365) target = $region48
      $region47: #{tpu_custom_call.1} parent=5 // pred_region
        %s369 = ssub.s32 %s27, 1
        %s370 = sand.u32 %s54, 1
        %s371 = scalar_lea.sflag [#allocation3], %s370
        %s372 = sand.u32 %s54, 1
        %s373 = smul.addr %s372, 8
        %s374 = scalar_lea.vmem [#allocation2], %s373
        // Predicated region
        $region49: #{tpu_custom_call.1} parent=47 // pred_check
          %p375 = pneg %p67
        $region50: #{tpu_custom_call.1} parent=47 // pred_check_branch
          %377 = sbr.rel (%p375) target = $region52
        $region51: #{tpu_custom_call.1} parent=47 // pred_region
          %378 = dma.done %s371, 128
        $region52: #{tpu_custom_call.1} parent=47 // pred_fallthru
          _
        // Predicated region
        $region53: #{tpu_custom_call.1} parent=47 // pred_check
          %p379 = pneg %p88
        $region54: #{tpu_custom_call.1} parent=47 // pred_check_branch
          %381 = sbr.rel (%p379) target = $region56
        $region55: #{tpu_custom_call.1} parent=47 // pred_region
          %382 = dma.done [#allocation6], 2048
        $region56: #{tpu_custom_call.1} parent=47 // pred_fallthru
          _
        // Predicated region
        $region57: #{tpu_custom_call.1} parent=47 // pred_check
          %p383 = pneg %p130
        $region58: #{tpu_custom_call.1} parent=47 // pred_check_branch
          %385 = sbr.rel (%p383) target = $region60
        $region59: #{tpu_custom_call.1} parent=47 // pred_region
          %386 = dma.done [#allocation6], 2048
        $region60: #{tpu_custom_call.1} parent=47 // pred_fallthru
          _
        // Predicated region
        $region61: #{tpu_custom_call.1} parent=47 // pred_check
          %p387 = pneg %p172
        $region62: #{tpu_custom_call.1} parent=47 // pred_check_branch
          %389 = sbr.rel (%p387) target = $region64
        $region63: #{tpu_custom_call.1} parent=47 // pred_region
          %390 = dma.done [#allocation9], 2048
        $region64: #{tpu_custom_call.1} parent=47 // pred_fallthru
          _
        %s391 = sand.u32 %s54, 1
        %s392 = scalar_lea.sflag [#allocation3], %s391
        %s393 = sand.u32 %s54, 1
        %s394 = smul.addr %s393, 8
        %s395 = scalar_lea.vmem [#allocation2], %s394
        %p396 = pneg %p67
        %p397 = pneg %p64
        %p398 = pneg %p88
        %p399 = pneg %p85
        %p400 = pneg %p109
        %p401 = pneg %p106
        %p402 = pneg %p130
        %p403 = pneg %p127
        %p404 = pneg %p151
        %p405 = pneg %p148
        %p406 = pneg %p172
        %p407 = pneg %p169
        %p408 = pneg %p193
        %p409 = pneg %p190
        %p410 = pneg %p221
        %p411 = pneg %p218
        %s412 = sand.u32 %s208, 1
        %s413 = scalar_lea.sflag [#allocation4], %s412
        %s414 = sand.u32 %s208, 1
        %s415 = smul.addr %s414, 8
        %s416 = scalar_lea.vmem [#allocation10], %s415
        %p417 = pneg %p249
        %p418 = pneg %p246
        %s419 = sand.u32 %s32, 1
        %s420 = scalar_lea.sflag [#allocation12], %s419
        %s421 = sand.u32 %s236, 1
        %s422 = smul.addr %s421, 8
        %s423 = scalar_lea.vmem [#allocation11], %s422
        %p424 = pneg %p277
        %p425 = pneg %p274
        %s426 = sand.u32 %s32, 1
        %s427 = scalar_lea.sflag [#allocation12], %s426
        %s428 = sand.u32 %s264, 1
        %s429 = smul.addr %s428, 8
        %s430 = scalar_lea.vmem [#allocation13], %s429
        %v431 = vld [vmem:[%s374] sm:$0xff]
        %v432 = vld [vmem:[#allocation5] sm:$0xff]
        %v433 = vld [vmem:[#allocation5 + $0x8] sm:$0xff]
        %v434 = vld [vmem:[#allocation5 + $0x10] sm:$0xff]
        %v435 = vld [vmem:[#allocation5 + $0x18] sm:$0xff]
        %v436 = vld [vmem:[#allocation5 + $0x20] sm:$0xff]
        %v437 = vld [vmem:[#allocation5 + $0x28] sm:$0xff]
        %v438 = vld [vmem:[#allocation5 + $0x30] sm:$0xff]
        %v439 = vld [vmem:[#allocation5 + $0x38] sm:$0xff]
        %v440 = vld [vmem:[#allocation5 + $0x40] sm:$0xff]
        %v441 = vld [vmem:[#allocation5 + $0x48] sm:$0xff]
        %v442 = vld [vmem:[#allocation5 + $0x50] sm:$0xff]
        %v443 = vld [vmem:[#allocation5 + $0x58] sm:$0xff]
        %v444 = vld [vmem:[#allocation5 + $0x60] sm:$0xff]
        %v445 = vld [vmem:[#allocation5 + $0x68] sm:$0xff]
        %v446 = vld [vmem:[#allocation5 + $0x70] sm:$0xff]
        %v447 = vld [vmem:[#allocation5 + $0x78] sm:$0xff]
        %v448 = vld [vmem:[%s2] sm:$0x1]
        %v450 = vlaneseq
        %v451 = vshrl.u32 %v450, 7
        %v452 = vsub.s32 0, %v451
        %v453 = vrot.slane %v448, %v452
        %455 = vmatprep.subr.mxu0 0.0
        %456 = vmatpush1.msra.mxu0 %v447
        %457 = vmatprep.subr.mxu0 0.0
        %458 = vmatpush1.msra.mxu0 %v446
        %459 = vmatprep.subr.mxu0 0.0
        %460 = vmatpush1.msra.mxu0 %v445
        %461 = vmatprep.subr.mxu0 0.0
        %462 = vmatpush1.msra.mxu0 %v444
        %463 = vmatprep.subr.mxu0 0.0
        %464 = vmatpush1.msra.mxu0 %v443
        %465 = vmatprep.subr.mxu0 0.0
        %466 = vmatpush1.msra.mxu0 %v442
        %467 = vmatprep.subr.mxu0 0.0
        %468 = vmatpush1.msra.mxu0 %v441
        %469 = vmatprep.subr.mxu0 0.0
        %470 = vmatpush1.msra.mxu0 %v440
        %471 = vmatprep.subr.mxu0 0.0
        %472 = vmatpush1.msra.mxu0 %v439
        %473 = vmatprep.subr.mxu0 0.0
        %474 = vmatpush1.msra.mxu0 %v438
        %475 = vmatprep.subr.mxu0 0.0
        %476 = vmatpush1.msra.mxu0 %v437
        %477 = vmatprep.subr.mxu0 0.0
        %478 = vmatpush1.msra.mxu0 %v436
        %479 = vmatprep.subr.mxu0 0.0
        %480 = vmatpush1.msra.mxu0 %v435
        %481 = vmatprep.subr.mxu0 0.0
        %482 = vmatpush1.msra.mxu0 %v434
        %483 = vmatprep.subr.mxu0 0.0
        %484 = vmatpush1.msra.mxu0 %v433
        %485 = vmatprep.subr.mxu0 0.0
        %486 = vmatpush1.msra.mxu0 %v432
        %487 = vmatprep.subr.mxu0 0.0
        %488 = vmatpush2.msra.mxu0 0.0
        %489 = vmatprep.subr.mxu0 0.0
        %490 = vmatpush2.msra.mxu0 0.0
        %491 = vmatprep.subr.mxu0 0.0
        %492 = vmatpush2.msra.mxu0 0.0
        %493 = vmatprep.subr.mxu0 0.0
        %494 = vmatpush2.msra.mxu0 0.0
        %495 = vmatprep.subr.mxu0 0.0
        %496 = vmatpush2.msra.mxu0 0.0
        %497 = vmatprep.subr.mxu0 0.0
        %498 = vmatpush2.msra.mxu0 0.0
        %499 = vmatprep.subr.mxu0 0.0
        %500 = vmatpush2.msra.mxu0 0.0
        %501 = vmatprep.subr.mxu0 0.0
        %502 = vmatpush2.msra.mxu0 0.0
        %503 = vmatprep.subr.mxu0 0.0
        %504 = vmatpush2.msra.mxu0 0.0
        %505 = vmatprep.subr.mxu0 0.0
        %506 = vmatpush2.msra.mxu0 0.0
        %507 = vmatprep.subr.mxu0 0.0
        %508 = vmatpush2.msra.mxu0 0.0
        %509 = vmatprep.subr.mxu0 0.0
        %510 = vmatpush2.msra.mxu0 0.0
        %511 = vmatprep.subr.mxu0 0.0
        %512 = vmatpush2.msra.mxu0 0.0
        %513 = vmatprep.subr.mxu0 0.0
        %514 = vmatpush2.msra.mxu0 0.0
        %515 = vmatprep.subr.mxu0 0.0
        %516 = vmatpush2.msra.mxu0 0.0
        %517 = vmatprep.subr.mxu0 0.0
        %518 = vmatpush2.msra.mxu0 0.0
        %519 = vmatprep.mubr.f32.mxu0 0.0
        %520 = vmatmul.mubr.f32.gmra.mxu0 %v431
        %v521 = vpop.f32.mrf.mxu0
        %v522 = vadd.f32 %v453, %v521
        %v523 = vpop.f32.mrf.mxu0
        %524 = vdwg.mxu0
        %v525 = vld [vmem:[#allocation7] sm:$0xff]
        %v526 = vld [vmem:[#allocation7 + $0x8] sm:$0xff]
        %v527 = vld [vmem:[#allocation7 + $0x10] sm:$0xff]
        %v528 = vld [vmem:[#allocation7 + $0x18] sm:$0xff]
        %v529 = vld [vmem:[#allocation7 + $0x20] sm:$0xff]
        %v530 = vld [vmem:[#allocation7 + $0x28] sm:$0xff]
        %v531 = vld [vmem:[#allocation7 + $0x30] sm:$0xff]
        %v532 = vld [vmem:[#allocation7 + $0x38] sm:$0xff]
        %v533 = vld [vmem:[#allocation7 + $0x40] sm:$0xff]
        %v534 = vld [vmem:[#allocation7 + $0x48] sm:$0xff]
        %v535 = vld [vmem:[#allocation7 + $0x50] sm:$0xff]
        %v536 = vld [vmem:[#allocation7 + $0x58] sm:$0xff]
        %v537 = vld [vmem:[#allocation7 + $0x60] sm:$0xff]
        %v538 = vld [vmem:[#allocation7 + $0x68] sm:$0xff]
        %v539 = vld [vmem:[#allocation7 + $0x70] sm:$0xff]
        %v540 = vld [vmem:[#allocation7 + $0x78] sm:$0xff]
        %v541 = vld [vmem:[%s4] sm:$0x1]
        %v543 = vlaneseq
        %v544 = vshrl.u32 %v543, 7
        %v545 = vsub.s32 0, %v544
        %v546 = vrot.slane %v541, %v545
        %548 = vmatprep.subr.mxu0 0.0
        %549 = vmatpush1.msra.mxu0 %v540
        %550 = vmatprep.subr.mxu0 0.0
        %551 = vmatpush1.msra.mxu0 %v539
        %552 = vmatprep.subr.mxu0 0.0
        %553 = vmatpush1.msra.mxu0 %v538
        %554 = vmatprep.subr.mxu0 0.0
        %555 = vmatpush1.msra.mxu0 %v537
        %556 = vmatprep.subr.mxu0 0.0
        %557 = vmatpush1.msra.mxu0 %v536
        %558 = vmatprep.subr.mxu0 0.0
        %559 = vmatpush1.msra.mxu0 %v535
        %560 = vmatprep.subr.mxu0 0.0
        %561 = vmatpush1.msra.mxu0 %v534
        %562 = vmatprep.subr.mxu0 0.0
        %563 = vmatpush1.msra.mxu0 %v533
        %564 = vmatprep.subr.mxu0 0.0
        %565 = vmatpush1.msra.mxu0 %v532
        %566 = vmatprep.subr.mxu0 0.0
        %567 = vmatpush1.msra.mxu0 %v531
        %568 = vmatprep.subr.mxu0 0.0
        %569 = vmatpush1.msra.mxu0 %v530
        %570 = vmatprep.subr.mxu0 0.0
        %571 = vmatpush1.msra.mxu0 %v529
        %572 = vmatprep.subr.mxu0 0.0
        %573 = vmatpush1.msra.mxu0 %v528
        %574 = vmatprep.subr.mxu0 0.0
        %575 = vmatpush1.msra.mxu0 %v527
        %576 = vmatprep.subr.mxu0 0.0
        %577 = vmatpush1.msra.mxu0 %v526
        %578 = vmatprep.subr.mxu0 0.0
        %579 = vmatpush1.msra.mxu0 %v525
        %580 = vmatprep.subr.mxu0 0.0
        %581 = vmatpush2.msra.mxu0 0.0
        %582 = vmatprep.subr.mxu0 0.0
        %583 = vmatpush2.msra.mxu0 0.0
        %584 = vmatprep.subr.mxu0 0.0
        %585 = vmatpush2.msra.mxu0 0.0
        %586 = vmatprep.subr.mxu0 0.0
        %587 = vmatpush2.msra.mxu0 0.0
        %588 = vmatprep.subr.mxu0 0.0
        %589 = vmatpush2.msra.mxu0 0.0
        %590 = vmatprep.subr.mxu0 0.0
        %591 = vmatpush2.msra.mxu0 0.0
        %592 = vmatprep.subr.mxu0 0.0
        %593 = vmatpush2.msra.mxu0 0.0
        %594 = vmatprep.subr.mxu0 0.0
        %595 = vmatpush2.msra.mxu0 0.0
        %596 = vmatprep.subr.mxu0 0.0
        %597 = vmatpush2.msra.mxu0 0.0
        %598 = vmatprep.subr.mxu0 0.0
        %599 = vmatpush2.msra.mxu0 0.0
        %600 = vmatprep.subr.mxu0 0.0
        %601 = vmatpush2.msra.mxu0 0.0
        %602 = vmatprep.subr.mxu0 0.0
        %603 = vmatpush2.msra.mxu0 0.0
        %604 = vmatprep.subr.mxu0 0.0
        %605 = vmatpush2.msra.mxu0 0.0
        %606 = vmatprep.subr.mxu0 0.0
        %607 = vmatpush2.msra.mxu0 0.0
        %608 = vmatprep.subr.mxu0 0.0
        %609 = vmatpush2.msra.mxu0 0.0
        %610 = vmatprep.subr.mxu0 0.0
        %611 = vmatpush2.msra.mxu0 0.0
        %612 = vmatprep.mubr.f32.mxu0 0.0
        %613 = vmatmul.mubr.f32.gmra.mxu0 %v431
        %v614 = vpop.f32.mrf.mxu0
        %v615 = vadd.f32 %v546, %v614
        %v616 = vpop.f32.mrf.mxu0
        %617 = vdwg.mxu0
        %v618 = vld [vmem:[#allocation8] sm:$0xff]
        %v619 = vld [vmem:[#allocation8 + $0x8] sm:$0xff]
        %v620 = vld [vmem:[#allocation8 + $0x10] sm:$0xff]
        %v621 = vld [vmem:[#allocation8 + $0x18] sm:$0xff]
        %v622 = vld [vmem:[#allocation8 + $0x20] sm:$0xff]
        %v623 = vld [vmem:[#allocation8 + $0x28] sm:$0xff]
        %v624 = vld [vmem:[#allocation8 + $0x30] sm:$0xff]
        %v625 = vld [vmem:[#allocation8 + $0x38] sm:$0xff]
        %v626 = vld [vmem:[#allocation8 + $0x40] sm:$0xff]
        %v627 = vld [vmem:[#allocation8 + $0x48] sm:$0xff]
        %v628 = vld [vmem:[#allocation8 + $0x50] sm:$0xff]
        %v629 = vld [vmem:[#allocation8 + $0x58] sm:$0xff]
        %v630 = vld [vmem:[#allocation8 + $0x60] sm:$0xff]
        %v631 = vld [vmem:[#allocation8 + $0x68] sm:$0xff]
        %v632 = vld [vmem:[#allocation8 + $0x70] sm:$0xff]
        %v633 = vld [vmem:[#allocation8 + $0x78] sm:$0xff]
        %v634 = vld [vmem:[%s6] sm:$0x1]
        %v636 = vlaneseq
        %v637 = vshrl.u32 %v636, 7
        %v638 = vsub.s32 0, %v637
        %v639 = vrot.slane %v634, %v638
        %641 = vmatprep.subr.mxu0 0.0
        %642 = vmatpush1.msra.mxu0 %v633
        %643 = vmatprep.subr.mxu0 0.0
        %644 = vmatpush1.msra.mxu0 %v632
        %645 = vmatprep.subr.mxu0 0.0
        %646 = vmatpush1.msra.mxu0 %v631
        %647 = vmatprep.subr.mxu0 0.0
        %648 = vmatpush1.msra.mxu0 %v630
        %649 = vmatprep.subr.mxu0 0.0
        %650 = vmatpush1.msra.mxu0 %v629
        %651 = vmatprep.subr.mxu0 0.0
        %652 = vmatpush1.msra.mxu0 %v628
        %653 = vmatprep.subr.mxu0 0.0
        %654 = vmatpush1.msra.mxu0 %v627
        %655 = vmatprep.subr.mxu0 0.0
        %656 = vmatpush1.msra.mxu0 %v626
        %657 = vmatprep.subr.mxu0 0.0
        %658 = vmatpush1.msra.mxu0 %v625
        %659 = vmatprep.subr.mxu0 0.0
        %660 = vmatpush1.msra.mxu0 %v624
        %661 = vmatprep.subr.mxu0 0.0
        %662 = vmatpush1.msra.mxu0 %v623
        %663 = vmatprep.subr.mxu0 0.0
        %664 = vmatpush1.msra.mxu0 %v622
        %665 = vmatprep.subr.mxu0 0.0
        %666 = vmatpush1.msra.mxu0 %v621
        %667 = vmatprep.subr.mxu0 0.0
        %668 = vmatpush1.msra.mxu0 %v620
        %669 = vmatprep.subr.mxu0 0.0
        %670 = vmatpush1.msra.mxu0 %v619
        %671 = vmatprep.subr.mxu0 0.0
        %672 = vmatpush1.msra.mxu0 %v618
        %673 = vmatprep.subr.mxu0 0.0
        %674 = vmatpush2.msra.mxu0 0.0
        %675 = vmatprep.subr.mxu0 0.0
        %676 = vmatpush2.msra.mxu0 0.0
        %677 = vmatprep.subr.mxu0 0.0
        %678 = vmatpush2.msra.mxu0 0.0
        %679 = vmatprep.subr.mxu0 0.0
        %680 = vmatpush2.msra.mxu0 0.0
        %681 = vmatprep.subr.mxu0 0.0
        %682 = vmatpush2.msra.mxu0 0.0
        %683 = vmatprep.subr.mxu0 0.0
        %684 = vmatpush2.msra.mxu0 0.0
        %685 = vmatprep.subr.mxu0 0.0
        %686 = vmatpush2.msra.mxu0 0.0
        %687 = vmatprep.subr.mxu0 0.0
        %688 = vmatpush2.msra.mxu0 0.0
        %689 = vmatprep.subr.mxu0 0.0
        %690 = vmatpush2.msra.mxu0 0.0
        %691 = vmatprep.subr.mxu0 0.0
        %692 = vmatpush2.msra.mxu0 0.0
        %693 = vmatprep.subr.mxu0 0.0
        %694 = vmatpush2.msra.mxu0 0.0
        %695 = vmatprep.subr.mxu0 0.0
        %696 = vmatpush2.msra.mxu0 0.0
        %697 = vmatprep.subr.mxu0 0.0
        %698 = vmatpush2.msra.mxu0 0.0
        %699 = vmatprep.subr.mxu0 0.0
        %700 = vmatpush2.msra.mxu0 0.0
        %701 = vmatprep.subr.mxu0 0.0
        %702 = vmatpush2.msra.mxu0 0.0
        %703 = vmatprep.subr.mxu0 0.0
        %704 = vmatpush2.msra.mxu0 0.0
        %705 = vmatprep.mubr.f32.mxu0 0.0
        %706 = vmatmul.mubr.f32.gmra.mxu0 %v431
        %v707 = vpop.f32.mrf.mxu0
        %v708 = vadd.f32 %v639, %v707
        %v709 = vpop.f32.mrf.mxu0
        %710 = vdwg.mxu0
        %711 = vst [vmem:[%s416] sm:$0xff] %v522
        %712 = vst [vmem:[%s423] sm:$0xff] %v615
        %713 = vst [vmem:[%s430] sm:$0xff] %v708
        %s714 = sand.u32 %s208, 1
        %s715 = scalar_lea.sflag [#allocation4], %s714
        %s716 = sand.u32 %s208, 1
        %s717 = smul.addr %s716, 8
        %s718 = scalar_lea.vmem [#allocation10], %s717
        %s719 = sand.u32 %s32, 1
        %s720 = scalar_lea.sflag [#allocation12], %s719
        %s721 = sand.u32 %s236, 1
        %s722 = smul.addr %s721, 8
        %s723 = scalar_lea.vmem [#allocation11], %s722
        %s724 = sand.u32 %s32, 1
        %s725 = scalar_lea.sflag [#allocation12], %s724
        %s726 = sand.u32 %s264, 1
        %s727 = smul.addr %s726, 8
        %s728 = scalar_lea.vmem [#allocation13], %s727
        // Predicated region
        $region65: #{tpu_custom_call.1} parent=47 // pred_check
          %p729 = pneg %p218
        $region66: #{tpu_custom_call.1} parent=47 // pred_check_branch
          %731 = sbr.rel (%p729) target = $region68
        $region67: #{tpu_custom_call.1} parent=47 // pred_region
          %s733 = ssub.s32 128, 128
          %734 = vsyncadd %s715, %s733
          %s735 = sadd.s32 %s37, %s36
          %s736 = smul.addr %s735, 128
          %s737 = scalar_lea.hbm %s7, %s736
          %s739 = sshll.u32 %s718, 4
          %s740 = int_to_ptr.vmem [resolvable:$true] %s739
          %742 = dma.vmem_to_hbm [thread:$0]  %s740, 128, %s737, %s715
        $region68: #{tpu_custom_call.1} parent=47 // pred_fallthru
          _
        // Predicated region
        $region69: #{tpu_custom_call.1} parent=47 // pred_check
          %p743 = pneg %p246
        $region70: #{tpu_custom_call.1} parent=47 // pred_check_branch
          %745 = sbr.rel (%p743) target = $region72
        $region71: #{tpu_custom_call.1} parent=47 // pred_region
          %s747 = ssub.s32 128, 128
          %748 = vsyncadd %s720, %s747
          %s749 = sadd.s32 %s37, %s36
          %s750 = smul.addr %s749, 128
          %s751 = scalar_lea.hbm %s8, %s750
          %s753 = sshll.u32 %s723, 4
          %s754 = int_to_ptr.vmem [resolvable:$true] %s753
          %756 = dma.vmem_to_hbm [thread:$0]  %s754, 128, %s751, %s720
        $region72: #{tpu_custom_call.1} parent=47 // pred_fallthru
          _
        // Predicated region
        $region73: #{tpu_custom_call.1} parent=47 // pred_check
          %p757 = pneg %p274
        $region74: #{tpu_custom_call.1} parent=47 // pred_check_branch
          %759 = sbr.rel (%p757) target = $region76
        $region75: #{tpu_custom_call.1} parent=47 // pred_region
          %s761 = ssub.s32 128, 128
          %762 = vsyncadd %s725, %s761
          %s763 = sadd.s32 %s37, %s36
          %s764 = smul.addr %s763, 128
          %s765 = scalar_lea.hbm %s9, %s764
          %s767 = sshll.u32 %s728, 4
          %s768 = int_to_ptr.vmem [resolvable:$true] %s767
          %770 = dma.vmem_to_hbm [thread:$0]  %s768, 128, %s765, %s725
        $region76: #{tpu_custom_call.1} parent=47 // pred_fallthru
          _
      $region48: #{tpu_custom_call.1} parent=5 // pred_fallthru
        _
      %p771 = scmp.le.s32.totalorder 2, %s27
      // Predicated region
      $region77: #{tpu_custom_call.1} parent=5 // pred_check
        %p772 = pneg %p771
      $region78: #{tpu_custom_call.1} parent=5 // pred_check_branch
        %774 = sbr.rel (%p772) target = $region80
      $region79: #{tpu_custom_call.1} parent=5 // pred_region
        %s775 = ssub.s32 %s27, 2
        // Predicated region
        $region81: #{tpu_custom_call.1} parent=79 // pred_check
          %p776 = pneg %p224
        $region82: #{tpu_custom_call.1} parent=79 // pred_check_branch
          %778 = sbr.rel (%p776) target = $region84
        $region83: #{tpu_custom_call.1} parent=79 // pred_region
          %s779 = sand.u32 %s209, 1
          %s780 = scalar_lea.sflag [#allocation4], %s779
          %s781 = sand.u32 %s209, 1
          %s782 = smul.addr %s781, 8
          %s783 = scalar_lea.vmem [#allocation10], %s782
          %784 = dma.done %s780, 128
        $region84: #{tpu_custom_call.1} parent=79 // pred_fallthru
          _
        // Predicated region
        $region85: #{tpu_custom_call.1} parent=79 // pred_check
          %p785 = pneg %p252
        $region86: #{tpu_custom_call.1} parent=79 // pred_check_branch
          %787 = sbr.rel (%p785) target = $region88
        $region87: #{tpu_custom_call.1} parent=79 // pred_region
          %s788 = sand.u32 %s33, 1
          %s789 = scalar_lea.sflag [#allocation12], %s788
          %s790 = sand.u32 %s237, 1
          %s791 = smul.addr %s790, 8
          %s792 = scalar_lea.vmem [#allocation11], %s791
          %793 = dma.done %s789, 128
        $region88: #{tpu_custom_call.1} parent=79 // pred_fallthru
          _
        // Predicated region
        $region89: #{tpu_custom_call.1} parent=79 // pred_check
          %p794 = pneg %p280
        $region90: #{tpu_custom_call.1} parent=79 // pred_check_branch
          %796 = sbr.rel (%p794) target = $region92
        $region91: #{tpu_custom_call.1} parent=79 // pred_region
          %s797 = sand.u32 %s33, 1
          %s798 = scalar_lea.sflag [#allocation12], %s797
          %s799 = sand.u32 %s265, 1
          %s800 = smul.addr %s799, 8
          %s801 = scalar_lea.vmem [#allocation13], %s800
          %802 = dma.done %s798, 128
        $region92: #{tpu_custom_call.1} parent=79 // pred_fallthru
          _
      $region80: #{tpu_custom_call.1} parent=5 // pred_fallthru
        _
    $region6: #{tpu_custom_call.1} parent=1 // loop_footer
      %s31 = sadd.s32 1, %s27
    $region7: #{tpu_custom_call.1} parent=1 // loop_footer_branch
      %26 = sbr.rel target = $region3
    $region8: #{tpu_custom_call.1} parent=1 // loop_exit
      _
    %803 = vsyncpa [#allocation3], 1
    %s804 = scalar_lea.sflag [#allocation3], 1
    %805 = vsyncpa %s804, 1
    %806 = vsyncpa [#allocation6], 1
    %807 = vsyncpa [#allocation9], 1
    %808 = vsyncpa [#allocation4], 1
    %s809 = scalar_lea.sflag [#allocation4], 1
    %810 = vsyncpa %s809, 1
    %811 = vsyncpa [#allocation12], 1
    %s812 = scalar_lea.sflag [#allocation12], 1
    %813 = vsyncpa %s812, 1

</llo_original>
